<compile_context>
chip_gen: v7x
topology: tpu7x:2x2x1
jax: 0.10.0
libtpu: 0.0.40
codegen_flags: <defaults>
</compile_context>

<pallas_src>
import math

import jax
import jax.numpy as jnp
import numpy as np
from jax.experimental import pallas as pl
from jax.experimental.pallas import tpu as pltpu


# Hamilton-product block structure of the assembled quaternion weight:
#   W[p_block, q_block] = _SIGN[p][q] * W_component[p ^ q]
# p = input component (row block), q = output component (column block),
# components ordered (r, i, j, k).  Matches the torch.cat construction in
# quaternion_linear().
_SIGN = (
    (+1, +1, +1, +1),
    (-1, +1, +1, -1),
    (-1, -1, +1, +1),
    (-1, +1, -1, +1),
)


def _cdiv(a, b):
    return -(-a // b)


def _round_up(x, m):
    return ((x + m - 1) // m) * m


def _tile_128(dim, target):
    """Largest multiple-of-128 divisor of `dim` (dim % 128 == 0) that is <= target."""
    assert dim % 128 == 0, dim
    a = dim // 128
    best = 1
    for d in range(1, a + 1):
        if a % d == 0 and 128 * d <= target:
            best = d
    return 128 * best


def _vmem_defaults():
    """Per-generation tile targets / VMEM caps (v5e/v6e: 128 MiB, v7x: 64 MiB)."""
    try:
        info = pltpu.get_tpu_info()
        vmem_cap = int(getattr(info, "vmem_capacity_bytes", 64 << 20))
    except Exception:
        vmem_cap = 64 << 20
    if vmem_cap >= (100 << 20):          # v5e / v6e: use the big VMEM
        return 1024, 1024, 100 << 20
    return 512, 512, 56 << 20            # v7x (or unknown): stay conservative


# --------------------------- decomposed Hamilton path ------------------------

def _quat_kernel(x0, x1, x2, x3, w0, w1, w2, w3, b_ref, o_ref, acc_ref):
    """One (tm, 4, tn) output tile (all 4 output components), accumulating over
    the K grid axis in an f32 VMEM scratch."""
    kk = pl.program_id(2)

    @pl.when(kk == 0)
    def _init():
        acc_ref[...] = jnp.zeros_like(acc_ref)

    xs = [x0[...], x1[...], x2[...], x3[...]]          # (tm, tk) bf16 each
    w_refs = (w0, w1, w2, w3)

    # Weight-stationary ordering: outer loop over the weight component c keeps
    # the same MXU RHS for 4 consecutive matmuls (q = p ^ c); signs are folded
    # into add/sub on the f32 accumulator (no extra VPU multiplies).
    for c in range(4):
        w_c = w_refs[c][...]                           # (tk, tn)
        for p in range(4):
            q = p ^ c
            prod = jnp.dot(xs[p], w_c, preferred_element_type=jnp.float32)
            if _SIGN[p][q] > 0:
                acc_ref[q] = acc_ref[q] + prod
            else:
                acc_ref[q] = acc_ref[q] - prod

    @pl.when(kk == pl.num_programs(2) - 1)
    def _finalize():
        b_all = b_ref[...]                             # (4, tn) f32
        for q in range(4):
            val = acc_ref[q] + b_all[q:q + 1, :]       # (tm, tn) f32
            o_ref[:, q:q + 1, :] = val[:, None, :].astype(o_ref.dtype)


def _quaternion_linear_decomposed(x, r_w, i_w, j_w, k_w, bias2d, compute_dtype,
                                  tm_target, tn_target, tk_target, vmem_cap_limit):
    M, K4 = x.shape
    in_f, out_f = r_w.shape
    out_dtype = x.dtype

    sub = 16 if compute_dtype == jnp.bfloat16 else 8
    n_m = int(_cdiv(M, tm_target))
    tm = _round_up(_cdiv(M, n_m), sub)
    m_pad = tm * n_m

    tk = _tile_128(in_f, tk_target)
    tn = _tile_128(out_f, tn_target)
    n_k = in_f // tk
    n_n = out_f // tn

    # Keep at least 2 blocks on a "parallel" axis when possible so both v7x
    # TensorCores get work.
    if n_m == 1 and n_n == 1 and (out_f // 128) > 1:
        a = out_f // 128
        d = max(dd for dd in range(1, a) if a % dd == 0)
        tn = 128 * d
        n_n = out_f // tn

    xc = x.astype(compute_dtype)
    if m_pad != M:
        xc = jnp.pad(xc, ((0, m_pad - M), (0, 0)))
    ws = [w.astype(compute_dtype) for w in (r_w, i_w, j_w, k_w)]

    kpb = in_f // tk                                   # K blocks per component

    def _x_map(p):
        return lambda mi, nj, kk, p=p: (mi, p * kpb + kk)

    x_specs = [pl.BlockSpec((tm, tk), _x_map(p)) for p in range(4)]
    w_specs = [pl.BlockSpec((tk, tn), lambda mi, nj, kk: (kk, nj)) for _ in range(4)]
    b_spec = pl.BlockSpec((4, tn), lambda mi, nj, kk: (0, nj))
    o_spec = pl.BlockSpec((tm, 4, tn), lambda mi, nj, kk: (mi, 0, nj))

    csize = jnp.dtype(compute_dtype).itemsize
    osize = jnp.dtype(out_dtype).itemsize
    x_blk = 4 * tm * tk * csize
    w_blk = 4 * tk * tn * csize
    o_blk = tm * 8 * tn * osize          # middle dim 4 pads to 8 sublanes in VMEM
    b_blk = 8 * tn * 4
    acc_blk = 4 * tm * tn * 4
    vmem_bytes = 2 * (x_blk + w_blk + o_blk + b_blk) + acc_blk
    vmem_limit = int(min(max(vmem_bytes + (16 << 20), 32 << 20), vmem_cap_limit))

    cost = pl.CostEstimate(
        flops=int(2 * m_pad * (4 * in_f) * (4 * out_f)),
        transcendentals=0,
        bytes_accessed=int(m_pad * 4 * in_f * csize * n_n
                           + 4 * in_f * out_f * csize * n_m
                           + m_pad * 4 * out_f * osize
                           + 4 * out_f * 4),
    )

    out3 = pl.pallas_call(
        _quat_kernel,
        out_shape=jax.ShapeDtypeStruct((m_pad, 4, out_f), out_dtype),
        grid_spec=pltpu.PrefetchScalarGridSpec(
            num_scalar_prefetch=0,
            grid=(n_m, n_n, n_k),                      # reduction (K) axis last
            in_specs=x_specs + w_specs + [b_spec],
            out_specs=o_spec,
            scratch_shapes=[pltpu.VMEM((4, tm, tn), jnp.float32)],
        ),
        compiler_params=pltpu.CompilerParams(
            dimension_semantics=("parallel", "parallel", "arbitrary"),
            vmem_limit_bytes=vmem_limit,
        ),
        cost_estimate=cost,
    )(xc, xc, xc, xc, ws[0], ws[1], ws[2], ws[3], bias2d)

    out = out3.reshape(m_pad, 4 * out_f)               # free view
    return out[:M] if m_pad != M else out


# --------------------------- dense fallback path -----------------------------

def _dense_kernel(x_ref, w_ref, b_ref, o_ref, acc_ref):
    kk = pl.program_id(2)

    @pl.when(kk == 0)
    def _init():
        acc_ref[...] = jnp.zeros_like(acc_ref)

    acc_ref[...] += jnp.dot(x_ref[...], w_ref[...],
                            preferred_element_type=jnp.float32)

    @pl.when(kk == pl.num_programs(2) - 1)
    def _finalize():
        o_ref[...] = (acc_ref[...] + b_ref[...]).astype(o_ref.dtype)


def _quaternion_linear_dense(x, r_w, i_w, j_w, k_w, bias, compute_dtype,
                             tm_target, tn_target, tk_target, vmem_cap_limit):
    """Small / lane-unaligned shapes: assemble the Hamilton matrix once in the
    wrapper (negligible at these sizes) and run one dense matmul."""
    M, K = x.shape
    in_f, out_f = r_w.shape
    N = 4 * out_f
    out_dtype = x.dtype

    cat_r = jnp.concatenate([r_w, -i_w, -j_w, -k_w], axis=0)
    cat_i = jnp.concatenate([i_w, r_w, -k_w, j_w], axis=0)
    cat_j = jnp.concatenate([j_w, k_w, r_w, -i_w], axis=0)
    cat_k = jnp.concatenate([k_w, -j_w, i_w, r_w], axis=0)
    w = jnp.concatenate([cat_r, cat_i, cat_j, cat_k], axis=1).astype(compute_dtype)

    sub = 16 if compute_dtype == jnp.bfloat16 else 8
    n_m = int(_cdiv(M, tm_target))
    tm = _round_up(_cdiv(M, n_m), sub)
    m_pad = tm * n_m
    k_pad = _round_up(K, 128)
    n_pad = _round_up(N, 128)
    tk = _tile_128(k_pad, tk_target)
    tn = _tile_128(n_pad, tn_target)
    n_k = k_pad // tk
    n_n = n_pad // tn

    xc = x.astype(compute_dtype)
    if m_pad != M or k_pad != K:
        xc = jnp.pad(xc, ((0, m_pad - M), (0, k_pad - K)))
    if k_pad != K or n_pad != N:
        w = jnp.pad(w, ((0, k_pad - K), (0, n_pad - N)))
    b = bias.astype(jnp.float32)
    if n_pad != N:
        b = jnp.pad(b, (0, n_pad - N))
    b = b.reshape(1, n_pad)

    csize = jnp.dtype(compute_dtype).itemsize
    osize = jnp.dtype(out_dtype).itemsize
    vmem_bytes = (2 * (tm * tk * csize + tk * tn * csize + tm * tn * osize + 8 * tn * 4)
                  + tm * tn * 4)
    vmem_limit = int(min(max(vmem_bytes + (16 << 20), 32 << 20), vmem_cap_limit))

    out = pl.pallas_call(
        _dense_kernel,
        out_shape=jax.ShapeDtypeStruct((m_pad, n_pad), out_dtype),
        grid_spec=pltpu.PrefetchScalarGridSpec(
            num_scalar_prefetch=0,
            grid=(n_m, n_n, n_k),
            in_specs=[
                pl.BlockSpec((tm, tk), lambda mi, nj, kk: (mi, kk)),
                pl.BlockSpec((tk, tn), lambda mi, nj, kk: (kk, nj)),
                pl.BlockSpec((1, tn), lambda mi, nj, kk: (0, nj)),
            ],
            out_specs=pl.BlockSpec((tm, tn), lambda mi, nj, kk: (mi, nj)),
            scratch_shapes=[pltpu.VMEM((tm, tn), jnp.float32)],
        ),
        compiler_params=pltpu.CompilerParams(
            dimension_semantics=("parallel", "parallel", "arbitrary"),
            vmem_limit_bytes=vmem_limit,
        ),
        cost_estimate=pl.CostEstimate(
            flops=int(2 * m_pad * k_pad * n_pad),
            transcendentals=0,
            bytes_accessed=int(m_pad * k_pad * csize * n_n
                               + k_pad * n_pad * csize * n_m
                               + m_pad * n_pad * osize),
        ),
    )(xc, w, b)

    if m_pad != M or n_pad != N:
        out = out[:M, :N]
    return out


# --------------------------------- wrapper -----------------------------------

def quaternion_linear(x, r_weight, i_weight, j_weight, k_weight, bias=None,
                      *, compute_dtype=jnp.bfloat16,
                      tile_m=256, tile_n=None, tile_k=None):
    """out = x @ W_hamilton(r,i,j,k) + bias;  x: (..., 4*in_f) -> (..., 4*out_f)."""
    in_f, out_f = r_weight.shape
    orig_shape = x.shape
    if x.ndim > 2:
        x = x.reshape(-1, orig_shape[-1])
    M, K4 = x.shape
    assert K4 == 4 * in_f, (K4, in_f)
    if bias is None:
        bias = jnp.zeros((4 * out_f,), jnp.float32)

    tn_def, tk_def, cap_limit = _vmem_defaults()
    tile_n = tn_def if tile_n is None else tile_n
    tile_k = tk_def if tile_k is None else tile_k

    small = (4 * in_f <= 1024) and (4 * out_f <= 1024)
    aligned = (in_f % 128 == 0) and (out_f % 128 == 0)
    if small or not aligned:
        out = _quaternion_linear_dense(x, r_weight, i_weight, j_weight, k_weight,
                                       bias, compute_dtype, tile_m, tile_n, tile_k,
                                       cap_limit)
    else:
        bias2d = bias.reshape(4, out_f).astype(jnp.float32)
        out = _quaternion_linear_decomposed(x, r_weight, i_weight, j_weight, k_weight,
                                            bias2d, compute_dtype, tile_m, tile_n,
                                            tile_k, cap_limit)
    if len(orig_shape) > 2:
        out = out.reshape(orig_shape[:-1] + (4 * out_f,))
    return out


# ----------------------------- reference & demo ------------------------------

def _reference(x, r_w, i_w, j_w, k_w, bias, compute_dtype):
    # Same math as quaternion_linear() / torch.addmm(bias, input, W), with the
    # operands rounded to the kernel's compute dtype (f32 accumulation).
    f = lambda a: a.astype(compute_dtype).astype(jnp.float32)
    cat_r = jnp.concatenate([f(r_w), -f(i_w), -f(j_w), -f(k_w)], axis=0)
    cat_i = jnp.concatenate([f(i_w), f(r_w), -f(k_w), f(j_w)], axis=0)
    cat_j = jnp.concatenate([f(j_w), f(k_w), f(r_w), -f(i_w)], axis=0)
    cat_k = jnp.concatenate([f(k_w), -f(j_w), f(i_w), f(r_w)], axis=0)
    w = jnp.concatenate([cat_r, cat_i, cat_j, cat_k], axis=1)
    y = jnp.matmul(f(x), w, precision=jax.lax.Precision.HIGHEST,
                   preferred_element_type=jnp.float32)
    return y + bias.astype(jnp.float32)


def _make_case(key, batch, in_features, out_features):
    in_f, out_f = in_features // 4, out_features // 4
    kx, kr, ki, kj, kk_, kb = jax.random.split(key, 6)
    # Deterministic glorot-style init standing in for quaternion_init
    # (synthetic weights, not a checkpoint load); bias made non-zero so the
    # bias path is actually exercised.
    limit = math.sqrt(2.0 / (in_f + out_f))
    mk = lambda k: jax.random.uniform(k, (in_f, out_f), jnp.float32, -limit, limit)
    r_w, i_w, j_w, k_w = mk(kr), mk(ki), mk(kj), mk(kk_)
    bias = 0.1 * jax.random.normal(kb, (out_features,), jnp.float32)
    x = jax.random.normal(kx, (batch, in_features), jnp.float32)
    return x, r_w, i_w, j_w, k_w, bias


if __name__ == "__main__":
    key = jax.random.PRNGKey(0)
    k1, k2, k3 = jax.random.split(key, 3)

    # Case 1: module demo config (in=out=128 -> per-component (32, 32)),
    # batch 16.  Small shape -> dense Hamilton fallback (single MXU matmul).
    x, r_w, i_w, j_w, k_w, bias = _make_case(k1, batch=16,
                                             in_features=128, out_features=128)
    out = jax.block_until_ready(quaternion_linear(x, r_w, i_w, j_w, k_w, bias))
    ref = _reference(x, r_w, i_w, j_w, k_w, bias, jnp.bfloat16)
    np.testing.assert_allclose(np.asarray(out), np.asarray(ref), rtol=2e-3, atol=2e-3)

    # Case 2: decomposed Hamilton path on a grid (2, 2, 2): non-divisible batch
    # (63 -> padded), lane-aligned per-component features, K-axis accumulation.
    x, r_w, i_w, j_w, k_w, bias = _make_case(k2, batch=63,
                                             in_features=2048, out_features=1024)
    out = jax.block_until_ready(
        quaternion_linear(x, r_w, i_w, j_w, k_w, bias,
                          tile_m=32, tile_n=128, tile_k=256))
    ref = _reference(x, r_w, i_w, j_w, k_w, bias, jnp.bfloat16)
    np.testing.assert_allclose(np.asarray(out), np.asarray(ref), rtol=2e-3, atol=2e-3)

    # Case 3: lane-unaligned shape -> dense fallback with K/N zero-padding.
    x, r_w, i_w, j_w, k_w, bias = _make_case(k3, batch=5,
                                             in_features=120, out_features=96)
    out = jax.block_until_ready(quaternion_linear(x, r_w, i_w, j_w, k_w, bias))
    ref = _reference(x, r_w, i_w, j_w, k_w, bias, jnp.bfloat16)
    np.testing.assert_allclose(np.asarray(out), np.asarray(ref), rtol=2e-3, atol=2e-3)

    print("KERNEL_OK")
</pallas_src>

<mosaic_0001>
module attributes {stable_mosaic.version = 11 : i64} {
  func.func @_dense_kernel(%arg0: i32, %arg1: i32, %arg2: i32, %arg3: memref<16x128xbf16, #tpu.memory_space<vmem>>, %arg4: memref<128x128xbf16, #tpu.memory_space<vmem>>, %arg5: memref<1x128xf32, #tpu.memory_space<vmem>>, %arg6: memref<16x128xf32, #tpu.memory_space<vmem>>, %arg7: memref<16x128xf32, #tpu.memory_space<vmem>>) attributes {dimension_semantics = [#tpu.dimension_semantics<parallel>, #tpu.dimension_semantics<parallel>, #tpu.dimension_semantics<arbitrary>], iteration_bounds = array<i64: 1, 1, 1>, scalar_prefetch = 0 : i64, scratch_operands = 1 : i64, tpu.core_type = #tpu.core_type<tc>, window_params = [{transform_indices = @transform_0, window_bounds = array<i64: 16, 128>}, {transform_indices = @transform_1, window_bounds = array<i64: 128, 128>}, {transform_indices = @transform_2, window_bounds = array<i64: 1, 128>}, {transform_indices = @transform_3, window_bounds = array<i64: 16, 128>}]} {
    %c0_i32 = arith.constant 0 : i32
    %0 = arith.cmpi eq, %arg2, %c0_i32 : i32
    %1 = arith.extui %0 : i1 to i32
    %c0_i32_0 = arith.constant 0 : i32
    %2 = arith.cmpi ne, %1, %c0_i32_0 : i32
    scf.if %2 {
      %cst_10 = arith.constant 0.000000e+00 : f32
      %12 = vector.broadcast %cst_10 : f32 to vector<16x128xf32>
      %c0_11 = arith.constant 0 : index
      %c0_12 = arith.constant 0 : index
      %13 = vector.load %arg7[%c0_11, %c0_12] : memref<16x128xf32, #tpu.memory_space<vmem>>, vector<16x128xf32>
      tpu.vector_store %arg7[%c0_11, %c0_12], %12 {strides = array<i32>} : memref<16x128xf32, #tpu.memory_space<vmem>>, vector<16x128xf32>,
    } else {
    }
    %c0 = arith.constant 0 : index
    %c0_1 = arith.constant 0 : index
    %3 = vector.load %arg7[%c0, %c0_1] : memref<16x128xf32, #tpu.memory_space<vmem>>, vector<16x128xf32>
    %c0_2 = arith.constant 0 : index
    %c0_3 = arith.constant 0 : index
    %4 = vector.load %arg3[%c0_2, %c0_3] : memref<16x128xbf16, #tpu.memory_space<vmem>>, vector<16x128xbf16>
    %c0_4 = arith.constant 0 : index
    %c0_5 = arith.constant 0 : index
    %5 = vector.load %arg4[%c0_4, %c0_5] : memref<128x128xbf16, #tpu.memory_space<vmem>>, vector<128x128xbf16>
    %cst = arith.constant dense<0.000000e+00> : vector<16x128xf32>
    %6 = tpu.matmul %4, %5, %cst {dimension_numbers = #tpu.dot_dimension_numbers<[1], [0], [0], [1], [0, 0, 1, 1], [], []>} : vector<16x128xbf16>, vector<128x128xbf16>, vector<16x128xf32> -> vector<16x128xf32>
    %7 = arith.addf %3, %6 : vector<16x128xf32>
    %c0_6 = arith.constant 0 : index
    %c0_7 = arith.constant 0 : index
    %8 = vector.load %arg7[%c0_6, %c0_7] : memref<16x128xf32, #tpu.memory_space<vmem>>, vector<16x128xf32>
    tpu.vector_store %arg7[%c0_6, %c0_7], %7 {strides = array<i32>} : memref<16x128xf32, #tpu.memory_space<vmem>>, vector<16x128xf32>,
    %c0_i32_8 = arith.constant 0 : i32
    %9 = arith.cmpi eq, %arg2, %c0_i32_8 : i32
    %10 = arith.extui %9 : i1 to i32
    %c0_i32_9 = arith.constant 0 : i32
    %11 = arith.cmpi ne, %10, %c0_i32_9 : i32
    scf.if %11 {
      %c0_10 = arith.constant 0 : index
      %c0_11 = arith.constant 0 : index
      %12 = vector.load %arg7[%c0_10, %c0_11] : memref<16x128xf32, #tpu.memory_space<vmem>>, vector<16x128xf32>
      %c0_12 = arith.constant 0 : index
      %c0_13 = arith.constant 0 : index
      %13 = vector.load %arg5[%c0_12, %c0_13] : memref<1x128xf32, #tpu.memory_space<vmem>>, vector<1x128xf32>
      %14 = vector.broadcast %13 : vector<1x128xf32> to vector<16x128xf32>
      %15 = arith.addf %12, %14 : vector<16x128xf32>
      %c0_14 = arith.constant 0 : index
      %c0_15 = arith.constant 0 : index
      %16 = vector.load %arg6[%c0_14, %c0_15] : memref<16x128xf32, #tpu.memory_space<vmem>>, vector<16x128xf32>
      tpu.vector_store %arg6[%c0_14, %c0_15], %15 {strides = array<i32>} : memref<16x128xf32, #tpu.memory_space<vmem>>, vector<16x128xf32>,
    } else {
    }
    return
  }
  func.func @transform_0(%arg0: i32, %arg1: i32, %arg2: i32) -> (i32, i32) {
    %c0_i32 = arith.constant 0 : i32
    return %arg0, %arg2 : i32, i32
  }
  func.func @transform_1(%arg0: i32, %arg1: i32, %arg2: i32) -> (i32, i32) {
    %c0_i32 = arith.constant 0 : i32
    return %arg2, %arg1 : i32, i32
  }
  func.func @transform_2(%arg0: i32, %arg1: i32, %arg2: i32) -> (i32, i32) {
    %c0_i32 = arith.constant 0 : i32
    %c0_i32_0 = arith.constant 0 : i32
    return %c0_i32, %arg1 : i32, i32
  }
  func.func @transform_3(%arg0: i32, %arg1: i32, %arg2: i32) -> (i32, i32) {
    %c0_i32 = arith.constant 0 : i32
    return %arg0, %arg1 : i32, i32
  }
}

</mosaic_0001>

<llo_original>
// kernel: tpu_custom_call.1
$region0: #{tpu_custom_call.1}
  #allocation0 [shape = 'u32[]', space=smem, size = 0x4, offset = 0x4, fixed_abs, tag = 'smem constant byte address 0x4 - core index']
  #allocation1 [shape = 'u32[144,128]{1,0:T(1,128)}', space=vmem, size = 0x12000, scoped, tag = 'internal scratch']
  #allocation2 [shape = 'f32[16,128]{1,0:T(8,128)}', space=vmem, size = 0x2000, scoped, tag = 'scratch operand']
  %s0 = inlined_call_operand.hbm [shape: bf16[16,128], index: 0, kind: input, shape index: {}]
  %s1 = inlined_call_operand.hbm [shape: bf16[128,128], index: 1, kind: input, shape index: {}]
  %s2 = inlined_call_operand.vmem [shape: f32[1,128], index: 2, kind: input, shape index: {}]
  %s3 = inlined_call_operand.hbm [shape: f32[16,128], index: 3, kind: output, shape index: {}]
  %s4 = sld [smem:[#allocation0]]
  $region38: #{tpu_custom_call.1} parent=0
    _
  %s6 = ssub.s32 1, %s4
  %s7 = scalar_select 0, %s6, %s4
  $region1: #{tpu_custom_call.1} parent=0
    #allocation3 [shape = 'u8[4096]{0}', space=vmem, size = 0x1000, scoped, tag = 'input window, operand 0, single buffered']
    #allocation4 [shape = 's32[1]{0}', space=sflag, size = 0x4, scoped, tag = 'scoped memory for tpu_custom_call.1']
    #allocation5 [shape = 's32[1]{0}', space=sflag, size = 0x4, scoped, tag = 'scoped memory for tpu_custom_call.1']
    #allocation6 [shape = 'u8[32768]{0}', space=vmem, size = 0x8000, scoped, tag = 'input window, operand 1, single buffered']
    #allocation7 [shape = 's32[1]{0}', space=sflag, size = 0x4, scoped, tag = 'scoped memory for tpu_custom_call.1']
    #allocation8 [shape = 'u8[8192]{0}', space=vmem, size = 0x2000, scoped, tag = 'output window, operand 0, single buffered']
    %8 = vsyncpa [#allocation4], 0
    %9 = vsyncpa [#allocation7], 0
    %10 = vsyncpa [#allocation5], 0
    // Predicated region
    $region2: #{tpu_custom_call.1} parent=1 // pred_check
      _
    $region3: #{tpu_custom_call.1} parent=1 // pred_check_branch
      %12 = sbr.rel (0) target = $region5
    $region4: #{tpu_custom_call.1} parent=1 // pred_region
      %s14 = ssub.s32 128, 128
      %15 = vsyncadd [#allocation4], %s14
      %s16 = sshll.u32 [#allocation3], 4
      %s17 = int_to_ptr.vmem [resolvable:$true] %s16
      %22 = dma.hbm_to_vmem [thread:$0]  %s0, 128, %s17, [#allocation4], 64, 64, 4
    $region5: #{tpu_custom_call.1} parent=1 // pred_fallthru
      _
    // Predicated region
    $region6: #{tpu_custom_call.1} parent=1 // pred_check
      _
    $region7: #{tpu_custom_call.1} parent=1 // pred_check_branch
      %24 = sbr.rel (0) target = $region9
    $region8: #{tpu_custom_call.1} parent=1 // pred_region
      %s26 = ssub.s32 1024, 1024
      %27 = vsyncadd [#allocation7], %s26
      %s28 = sshll.u32 [#allocation6], 4
      %s29 = int_to_ptr.vmem [resolvable:$true] %s28
      %34 = dma.hbm_to_vmem [thread:$0]  %s1, 1024, %s29, [#allocation7], 64, 64, 4
    $region9: #{tpu_custom_call.1} parent=1 // pred_fallthru
      _
    // Predicated region
    $region10: #{tpu_custom_call.1} parent=1 // pred_check
      _
    $region11: #{tpu_custom_call.1} parent=1 // pred_check_branch
      %36 = sbr.rel (0) target = $region13
    $region12: #{tpu_custom_call.1} parent=1 // pred_region
      _
    $region13: #{tpu_custom_call.1} parent=1 // pred_fallthru
      _
    // Predicated region
    $region14: #{tpu_custom_call.1} parent=1 // pred_check
      _
    $region15: #{tpu_custom_call.1} parent=1 // pred_check_branch
      %38 = sbr.rel (0) target = $region17
    $region16: #{tpu_custom_call.1} parent=1 // pred_region
      %39 = dma.done [#allocation4], 128
    $region17: #{tpu_custom_call.1} parent=1 // pred_fallthru
      _
    // Predicated region
    $region18: #{tpu_custom_call.1} parent=1 // pred_check
      _
    $region19: #{tpu_custom_call.1} parent=1 // pred_check_branch
      %41 = sbr.rel (0) target = $region21
    $region20: #{tpu_custom_call.1} parent=1 // pred_region
      %42 = dma.done [#allocation7], 1024
    $region21: #{tpu_custom_call.1} parent=1 // pred_fallthru
      _
    %p44 = scmp.eq.s32.totalorder 0, 0
    // Predicated region
    $region22: #{tpu_custom_call.1} parent=1 // pred_check
      %p45 = pneg %p44
    $region23: #{tpu_custom_call.1} parent=1 // pred_check_branch
      %47 = sbr.rel (%p45) target = $region25
    $region24: #{tpu_custom_call.1} parent=1 // pred_region
      %48 = vst [vmem:[#allocation2] sm:$0xff] 0.0
      %49 = vst [vmem:[#allocation2 + $0x8] sm:$0xff] 0.0
    $region25: #{tpu_custom_call.1} parent=1 // pred_fallthru
      _
    %v50 = vld [vmem:[#allocation2] sm:$0xff]
    %v51 = vld [vmem:[#allocation2 + $0x8] sm:$0xff]
    %v52 = vld [vmem:[#allocation3] sm:$0xf]
    %v53 = vld [vmem:[#allocation3 + $0x4] sm:$0xf]
    %v54 = vld [vmem:[#allocation6] sm:$0xf]
    %v55 = vld [vmem:[#allocation6 + $0x4] sm:$0xf]
    %v56 = vld [vmem:[#allocation6 + $0x8] sm:$0xf]
    %v57 = vld [vmem:[#allocation6 + $0xc] sm:$0xf]
    %v58 = vld [vmem:[#allocation6 + $0x10] sm:$0xf]
    %v59 = vld [vmem:[#allocation6 + $0x14] sm:$0xf]
    %v60 = vld [vmem:[#allocation6 + $0x18] sm:$0xf]
    %v61 = vld [vmem:[#allocation6 + $0x1c] sm:$0xf]
    %v62 = vld [vmem:[#allocation6 + $0x20] sm:$0xf]
    %v63 = vld [vmem:[#allocation6 + $0x24] sm:$0xf]
    %v64 = vld [vmem:[#allocation6 + $0x28] sm:$0xf]
    %v65 = vld [vmem:[#allocation6 + $0x2c] sm:$0xf]
    %v66 = vld [vmem:[#allocation6 + $0x30] sm:$0xf]
    %v67 = vld [vmem:[#allocation6 + $0x34] sm:$0xf]
    %v68 = vld [vmem:[#allocation6 + $0x38] sm:$0xf]
    %v69 = vld [vmem:[#allocation6 + $0x3c] sm:$0xf]
    %v72 = vunpack.c.l.b16 %v52
    %v73 = vunpack.c.l.b16 %v53
    %v74 = vpack.c.b16 %v73, %v72
    %v92 = vunpack.c.l.b16 %v54
    %v93 = vunpack.c.l.b16 %v55
    %v94 = vunpack.c.l.b16 %v56
    %v95 = vunpack.c.l.b16 %v57
    %v96 = vunpack.c.l.b16 %v58
    %v97 = vunpack.c.l.b16 %v59
    %v98 = vunpack.c.l.b16 %v60
    %v99 = vunpack.c.l.b16 %v61
    %v100 = vunpack.c.l.b16 %v62
    %v101 = vunpack.c.l.b16 %v63
    %v102 = vunpack.c.l.b16 %v64
    %v103 = vunpack.c.l.b16 %v65
    %v104 = vunpack.c.l.b16 %v66
    %v105 = vunpack.c.l.b16 %v67
    %v106 = vunpack.c.l.b16 %v68
    %v107 = vunpack.c.l.b16 %v69
    %v108 = vpack.c.b16 %v93, %v92
    %v109 = vpack.c.b16 %v95, %v94
    %v110 = vpack.c.b16 %v97, %v96
    %v111 = vpack.c.b16 %v99, %v98
    %v112 = vpack.c.b16 %v101, %v100
    %v113 = vpack.c.b16 %v103, %v102
    %v114 = vpack.c.b16 %v105, %v104
    %v115 = vpack.c.b16 %v107, %v106
    %124 = vmatprep.subr.bf16.mxu0 0
    %125 = vmatpush1.bf16.msra.mxu0 %v108
    %126 = vmatprep.subr.bf16.mxu0 0
    %127 = vmatpush1.bf16.msra.mxu0 %v109
    %128 = vmatprep.subr.bf16.mxu0 0
    %129 = vmatpush1.bf16.msra.mxu0 %v110
    %130 = vmatprep.subr.bf16.mxu0 0
    %131 = vmatpush1.bf16.msra.mxu0 %v111
    %132 = vmatprep.subr.bf16.mxu0 0
    %133 = vmatpush1.bf16.msra.mxu0 %v112
    %134 = vmatprep.subr.bf16.mxu0 0
    %135 = vmatpush1.bf16.msra.mxu0 %v113
    %136 = vmatprep.subr.bf16.mxu0 0
    %137 = vmatpush1.bf16.msra.mxu0 %v114
    %138 = vmatprep.subr.bf16.mxu0 0
    %139 = vmatpush1.bf16.msra.mxu0 %v115
    %140 = vmatprep.subr.bf16.mxu0 0
    %141 = vmatpush1.bf16.msra.mxu0 0
    %142 = vmatprep.subr.bf16.mxu0 0
    %143 = vmatpush1.bf16.msra.mxu0 0
    %144 = vmatprep.subr.bf16.mxu0 0
    %145 = vmatpush1.bf16.msra.mxu0 0
    %146 = vmatprep.subr.bf16.mxu0 0
    %147 = vmatpush1.bf16.msra.mxu0 0
    %148 = vmatprep.subr.bf16.mxu0 0
    %149 = vmatpush1.bf16.msra.mxu0 0
    %150 = vmatprep.subr.bf16.mxu0 0
    %151 = vmatpush1.bf16.msra.mxu0 0
    %152 = vmatprep.subr.bf16.mxu0 0
    %153 = vmatpush1.bf16.msra.mxu0 0
    %154 = vmatprep.subr.bf16.mxu0 0
    %155 = vmatpush1.bf16.msra.mxu0 0
    %156 = vmatprep.mubr.bf16.mxu0 0
    %157 = vmatmul.mubr.bf16.gmra.mrb[0].mxu0 %v74
    %v158 = vpop.f32.mrb[0].mxu0
    %v159 = vadd.f32 0.0, %v158
    %v160 = vpop.f32.mrb[0].mxu0
    %v161 = vpop.f32.mrb[0].mxu0
    %v162 = vadd.f32 0.0, %v161
    %v163 = vpop.f32.mrb[0].mxu0
    %164 = vdwg.mxu0
    %v165 = vadd.f32 %v50, %v159
    %v166 = vadd.f32 %v51, %v162
    %167 = vst [vmem:[#allocation2] sm:$0xff] %v165
    %168 = vst [vmem:[#allocation2 + $0x8] sm:$0xff] %v166
    // Predicated region
    $region26: #{tpu_custom_call.1} parent=1 // pred_check
      %p169 = pneg %p44
    $region27: #{tpu_custom_call.1} parent=1 // pred_check_branch
      %171 = sbr.rel (%p169) target = $region29
    $region28: #{tpu_custom_call.1} parent=1 // pred_region
      %v172 = vld [vmem:[#allocation2] sm:$0xff]
      %v173 = vld [vmem:[#allocation2 + $0x8] sm:$0xff]
      %v174 = vld [vmem:[%s2] sm:$0x1]
      %v176 = vlaneseq
      %v177 = vshrl.u32 %v176, 7
      %v178 = vsub.s32 0, %v177
      %v179 = vrot.slane %v174, %v178
      %v181 = vadd.f32 %v172, %v179
      %v182 = vadd.f32 %v173, %v179
      %183 = vst [vmem:[#allocation8] sm:$0xff] %v181
      %184 = vst [vmem:[#allocation8 + $0x8] sm:$0xff] %v182
    $region29: #{tpu_custom_call.1} parent=1 // pred_fallthru
      _
    // Predicated region
    $region30: #{tpu_custom_call.1} parent=1 // pred_check
      _
    $region31: #{tpu_custom_call.1} parent=1 // pred_check_branch
      %186 = sbr.rel (0) target = $region33
    $region32: #{tpu_custom_call.1} parent=1 // pred_region
      %s188 = ssub.s32 256, 256
      %189 = vsyncadd [#allocation5], %s188
      %s190 = sshll.u32 [#allocation8], 4
      %s191 = int_to_ptr.vmem [resolvable:$true] %s190
      %196 = dma.vmem_to_hbm [thread:$0]  %s191, 256, %s3, [#allocation5], 128, 128, 8
    $region33: #{tpu_custom_call.1} parent=1 // pred_fallthru
      _
    // Predicated region
    $region34: #{tpu_custom_call.1} parent=1 // pred_check
      _
    $region35: #{tpu_custom_call.1} parent=1 // pred_check_branch
      %198 = sbr.rel (0) target = $region37
    $region36: #{tpu_custom_call.1} parent=1 // pred_region
      %199 = dma.done [#allocation5], 256
    $region37: #{tpu_custom_call.1} parent=1 // pred_fallthru
      _
    %200 = vsyncpa [#allocation4], 1
    %201 = vsyncpa [#allocation7], 1
    %202 = vsyncpa [#allocation5], 1

</llo_original>
